<compile_context>
chip_gen: v5e
topology: v5e:2x2
jax: 0.10.0
libtpu: 0.0.40
codegen_flags: <defaults>
</compile_context>

<pallas_src>
import functools

import jax
import jax.numpy as jnp
from jax.experimental import pallas as pl
from jax.experimental.pallas import tpu as pltpu


def se_kernel(x_ref, w1_ref, w2_ref, o_ref, *, inv_hw):
    # x_ref:  (Bt, C, HWp)  block of batch elements, spatial flattened + lane-padded
    # w1_ref: (C, Cr)       fc1 weight, (in, out) layout
    # w2_ref: (Cr, C)       fc2 weight, (in, out) layout

    # Squeeze: global average pool over the lane-dense (zero-padded) spatial
    # axis.  Padded lanes are zeros, so summing the whole axis and scaling by
    # 1/true_HW gives the exact mean.  Accumulate in f32.
    y = jnp.sum(x_ref[...], axis=-1, dtype=jnp.float32) * inv_hw        # (Bt, C)

    # Excitation: two tiny bias-free matmuls (MXU), ReLU + sigmoid, all f32.
    h = jnp.dot(y, w1_ref[...], preferred_element_type=jnp.float32)     # (Bt, Cr)
    h = jnp.maximum(h, 0.0)
    s = jnp.dot(h, w2_ref[...], preferred_element_type=jnp.float32)     # (Bt, C)
    s = jax.nn.sigmoid(s)

    # Scale: re-read the already-resident block (no multi-MiB live value across
    # the matmuls), multiply in f32, single cast at the store.
    o_ref[...] = (x_ref[...].astype(jnp.float32) * s[:, :, None]).astype(o_ref.dtype)


def _tpu_budget():
    """Per-generation VMEM cap / block-size target / core count heuristic."""
    try:
        vmem_phys = int(pltpu.get_tpu_info().vmem_capacity_bytes)
    except Exception:
        vmem_phys = 64 << 20  # conservative fallback: v7x per-TC VMEM
    # v7x: 64 MiB per TC, 2 TensorCores.  v5e/v6e: 128 MiB, 1 TensorCore.
    two_cores = vmem_phys <= (64 << 20)
    if two_cores:
        vmem_cap = 52 << 20      # stay well under 64 MiB physical
        target_bytes = 10 << 20  # ~3 us of DMA at 3.2 TB/s; per-step overhead <4%
    else:
        vmem_cap = 96 << 20      # 128 MiB physical; default scoped limit is far lower
        target_bytes = 12 << 20
    return vmem_cap, target_bytes, two_cores


def _choose_block_batch(B, per_batch_bytes, target_bytes, max_block_bytes, two_cores):
    """Batch elements per grid step: big blocks, whole sublanes, no divisor search."""
    budget = max(1, min(target_bytes, max_block_bytes))
    bt = max(1, min(B, budget // max(per_batch_bytes, 1)))
    if bt >= 8:
        bt -= bt % 8  # full sublanes for the pooled (bt, C) matrix / scale splat
    # Only v7x (2 TensorCores) benefits from keeping >= 2 grid steps.
    if two_cores and B > 1 and pl.cdiv(B, bt) < 2:
        bt = pl.cdiv(B, 2)
    return bt


def se_layer(x, w1, w2, *, donate_input=False):
    """x: (B, C, H, W) NCHW.  w1: (Cr, C), w2: (C, Cr)  (PyTorch nn.Linear layout)."""
    B, C, H, W = x.shape
    Cr = w1.shape[0]
    HW = H * W
    itemsize = jnp.dtype(x.dtype).itemsize
    w_itemsize = jnp.dtype(w1.dtype).itemsize

    # Free reshape for contiguous NCHW; then pad the spatial axis up to a
    # multiple of 128 so the kernel's lane dim is dense (no masked vst.msk).
    x2 = x.reshape(B, C, HW)
    HW_pad = ((HW + 127) // 128) * 128
    if HW_pad != HW:
        x2 = jnp.pad(x2, ((0, 0), (0, 0), (0, HW_pad - HW)))

    # Transpose weights once to (in, out) so the kernel does plain y @ W.
    w1_t = w1.T  # (C, Cr)
    w2_t = w2.T  # (Cr, C)

    vmem_cap, target_bytes, two_cores = _tpu_budget()

    w_bytes = 2 * (C * Cr) * w_itemsize
    slack = 2 << 20
    per_batch_bytes = C * HW_pad * itemsize
    # Double-buffered input + double-buffered output must fit under the cap.
    max_block_bytes = max(per_batch_bytes, (vmem_cap - w_bytes - slack) // 4)

    bt = _choose_block_batch(B, per_batch_bytes, target_bytes, max_block_bytes, two_cores)
    grid = (pl.cdiv(B, bt),)

    block_bytes = bt * per_batch_bytes
    vmem_needed = 4 * block_bytes + 2 * w_bytes + slack
    if vmem_needed > vmem_cap:
        # TODO(synk): a single batch element no longer fits double-buffered under
        # the per-core VMEM cap; fall back to a two-phase (pool-then-scale)
        # kernel with HW tiled on a second grid axis.
        pass
    vmem_limit = int(min(max(vmem_needed, 16 << 20), vmem_cap))

    cost = pl.CostEstimate(
        # pool sum + final elementwise scale + two tiny matmuls
        flops=2 * B * C * HW + 4 * B * C * Cr,
        transcendentals=B * C,
        bytes_accessed=2 * B * C * HW_pad * itemsize + 2 * (C * Cr) * w_itemsize,
    )

    kernel = functools.partial(se_kernel, inv_hw=float(1.0 / HW))

    out2 = pl.pallas_call(
        kernel,
        out_shape=jax.ShapeDtypeStruct((B, C, HW_pad), x.dtype),
        grid_spec=pltpu.PrefetchScalarGridSpec(
            num_scalar_prefetch=0,
            grid=grid,
            in_specs=[
                pl.BlockSpec((bt, C, HW_pad), lambda i: (i, 0, 0)),
                pl.BlockSpec((C, Cr), lambda i: (0, 0)),
                pl.BlockSpec((Cr, C), lambda i: (0, 0)),
            ],
            out_specs=pl.BlockSpec((bt, C, HW_pad), lambda i: (i, 0, 0)),
        ),
        compiler_params=pltpu.CompilerParams(
            # On v7x, verify in the trace that this axis is split across both
            # TensorCores; if not, switch to pltpu.CORE_PARALLEL here.
            dimension_semantics=("parallel",),
            vmem_limit_bytes=vmem_limit,
        ),
        cost_estimate=cost,
        input_output_aliases=({0: 0} if donate_input else {}),
    )(x2, w1_t, w2_t)

    if HW_pad != HW:
        out2 = out2[:, :, :HW]
    return out2.reshape(B, C, H, W)


def se_layer_ref(x, w1, w2):
    """Pure-JAX reference matching the PyTorch module."""
    y = jnp.mean(x, axis=(2, 3))                        # (B, C)
    h = jnp.maximum(y @ w1.T, 0.0)                      # (B, Cr)
    s = jax.nn.sigmoid(h @ w2.T)                        # (B, C)
    return x * s[:, :, None, None]


if __name__ == "__main__":
    B, C, H, W = 2, 32, 16, 16
    reduction = 16
    Cr = C // reduction

    key = jax.random.PRNGKey(0)
    kx, k1, k2 = jax.random.split(key, 3)

    x = jax.random.normal(kx, (B, C, H, W), dtype=jnp.float32)
    # Deterministic synthetic weights (PyTorch nn.Linear layout: (out, in)).
    w1 = jax.random.normal(k1, (Cr, C), dtype=jnp.float32) * 0.1
    w2 = jax.random.normal(k2, (C, Cr), dtype=jnp.float32) * 0.1

    out = se_layer(x, w1, w2)
    out = jax.block_until_ready(out)

    ref = se_layer_ref(x, w1, w2)
    assert out.shape == (B, C, H, W)
    assert jnp.allclose(out, ref, atol=1e-5, rtol=1e-5), "mismatch vs reference"

    # Also exercise a lane-padded (HW % 128 != 0) and ragged-batch path.
    B2, H2, W2 = 3, 7, 7
    x_odd = jax.random.normal(kx, (B2, C, H2, W2), dtype=jnp.float32)
    out_odd = jax.block_until_ready(se_layer(x_odd, w1, w2))
    ref_odd = se_layer_ref(x_odd, w1, w2)
    assert jnp.allclose(out_odd, ref_odd, atol=1e-5, rtol=1e-5), "mismatch (padded path)"

    print("KERNEL_OK")
</pallas_src>

<mosaic_0001>
module attributes {stable_mosaic.version = 11 : i64} {
  func.func @se_kernel(%arg0: i32, %arg1: memref<1x32x256xf32, #tpu.memory_space<vmem>>, %arg2: memref<32x2xf32, #tpu.memory_space<vmem>>, %arg3: memref<2x32xf32, #tpu.memory_space<vmem>>, %arg4: memref<1x32x256xf32, #tpu.memory_space<vmem>>) attributes {dimension_semantics = [#tpu.dimension_semantics<parallel>], iteration_bounds = array<i64: 2>, scalar_prefetch = 0 : i64, scratch_operands = 0 : i64, tpu.core_type = #tpu.core_type<tc>, window_params = [{transform_indices = @transform_0, window_bounds = array<i64: 1, 32, 256>}, {pipeline_mode = #tpu.pipeline_mode<synchronous>, transform_indices = @transform_1, window_bounds = array<i64: 32, 2>}, {pipeline_mode = #tpu.pipeline_mode<synchronous>, transform_indices = @transform_2, window_bounds = array<i64: 2, 32>}, {transform_indices = @transform_3, window_bounds = array<i64: 1, 32, 256>}]} {
    %c0 = arith.constant 0 : index
    %c0_0 = arith.constant 0 : index
    %c0_1 = arith.constant 0 : index
    %0 = vector.load %arg1[%c0, %c0_0, %c0_1] : memref<1x32x256xf32, #tpu.memory_space<vmem>>, vector<1x32x256xf32>
    %cst = arith.constant dense<0.000000e+00> : vector<1x32xf32>
    %1 = vector.multi_reduction <add>, %0, %cst [2] : vector<1x32x256xf32> to vector<1x32xf32>
    %cst_2 = arith.constant 3.906250e-03 : f32
    %2 = vector.broadcast %cst_2 : f32 to vector<1x32xf32>
    %3 = arith.mulf %1, %2 : vector<1x32xf32>
    %c0_3 = arith.constant 0 : index
    %c0_4 = arith.constant 0 : index
    %4 = vector.load %arg2[%c0_3, %c0_4] : memref<32x2xf32, #tpu.memory_space<vmem>>, vector<32x2xf32>
    %cst_5 = arith.constant dense<0.000000e+00> : vector<1x2xf32>
    %5 = tpu.matmul %3, %4, %cst_5 {dimension_numbers = #tpu.dot_dimension_numbers<[1], [0], [0], [1], [0, 0, 1, 1], [], []>} : vector<1x32xf32>, vector<32x2xf32>, vector<1x2xf32> -> vector<1x2xf32>
    %cst_6 = arith.constant 0.000000e+00 : f32
    %6 = vector.broadcast %cst_6 : f32 to vector<1x2xf32>
    %7 = arith.maximumf %5, %6 : vector<1x2xf32>
    %c0_7 = arith.constant 0 : index
    %c0_8 = arith.constant 0 : index
    %8 = vector.load %arg3[%c0_7, %c0_8] : memref<2x32xf32, #tpu.memory_space<vmem>>, vector<2x32xf32>
    %cst_9 = arith.constant dense<0.000000e+00> : vector<1x32xf32>
    %9 = tpu.matmul %7, %8, %cst_9 {dimension_numbers = #tpu.dot_dimension_numbers<[1], [0], [0], [1], [0, 0, 1, 1], [], []>} : vector<1x2xf32>, vector<2x32xf32>, vector<1x32xf32> -> vector<1x32xf32>
    %10 = arith.negf %9 : vector<1x32xf32>
    %11 = math.exp %10 : vector<1x32xf32>
    %cst_10 = arith.constant 1.000000e+00 : f32
    %12 = vector.broadcast %cst_10 : f32 to vector<1x32xf32>
    %13 = arith.addf %12, %11 : vector<1x32xf32>
    %14 = arith.divf %12, %13 : vector<1x32xf32>
    %c0_11 = arith.constant 0 : index
    %c0_12 = arith.constant 0 : index
    %c0_13 = arith.constant 0 : index
    %15 = vector.load %arg1[%c0_11, %c0_12, %c0_13] : memref<1x32x256xf32, #tpu.memory_space<vmem>>, vector<1x32x256xf32>
    %16 = vector.shape_cast %14 : vector<1x32xf32> to vector<1x32x1xf32>
    %17 = vector.broadcast %16 : vector<1x32x1xf32> to vector<1x32x256xf32>
    %18 = arith.mulf %15, %17 : vector<1x32x256xf32>
    %c0_14 = arith.constant 0 : index
    %c0_15 = arith.constant 0 : index
    %c0_16 = arith.constant 0 : index
    %19 = vector.load %arg4[%c0_14, %c0_15, %c0_16] : memref<1x32x256xf32, #tpu.memory_space<vmem>>, vector<1x32x256xf32>
    tpu.vector_store %arg4[%c0_14, %c0_15, %c0_16], %18 {strides = array<i32>} : memref<1x32x256xf32, #tpu.memory_space<vmem>>, vector<1x32x256xf32>,
    return
  }
  func.func @transform_0(%arg0: i32) -> (i32, i32, i32) {
    %c0_i32 = arith.constant 0 : i32
    %c0_i32_0 = arith.constant 0 : i32
    %c0_i32_1 = arith.constant 0 : i32
    return %arg0, %c0_i32, %c0_i32_0 : i32, i32, i32
  }
  func.func @transform_1(%arg0: i32) -> (i32, i32) {
    %c0_i32 = arith.constant 0 : i32
    %c0_i32_0 = arith.constant 0 : i32
    %c0_i32_1 = arith.constant 0 : i32
    return %c0_i32, %c0_i32_0 : i32, i32
  }
  func.func @transform_2(%arg0: i32) -> (i32, i32) {
    %c0_i32 = arith.constant 0 : i32
    %c0_i32_0 = arith.constant 0 : i32
    %c0_i32_1 = arith.constant 0 : i32
    return %c0_i32, %c0_i32_0 : i32, i32
  }
  func.func @transform_3(%arg0: i32) -> (i32, i32, i32) {
    %c0_i32 = arith.constant 0 : i32
    %c0_i32_0 = arith.constant 0 : i32
    %c0_i32_1 = arith.constant 0 : i32
    return %arg0, %c0_i32, %c0_i32_0 : i32, i32, i32
  }
}

</mosaic_0001>

<llo_original>
// kernel: tpu_custom_call.1
$region0: #{tpu_custom_call.1}
  #allocation0 [shape = 'u32[]', space=smem, size = 0x4, offset = 0x4, fixed_abs, tag = 'smem constant byte address 0x4 - core index']
  #allocation1 [shape = 'u32[72,128]{1,0:T(1,128)}', space=vmem, size = 0x9000, scoped, tag = 'internal scratch']
  %s0 = inlined_call_operand.hbm [shape: f32[2,32,256], index: 0, kind: input, shape index: {}]
  %s1 = inlined_call_operand.vmem [shape: f32[32,2], index: 1, kind: input, shape index: {}]
  %s2 = inlined_call_operand.vmem [shape: f32[2,32], index: 2, kind: input, shape index: {}]
  %s3 = inlined_call_operand.hbm [shape: f32[2,32,256], index: 3, kind: output, shape index: {}]
  %s4 = sld [smem:[#allocation0]]
  $region49: #{tpu_custom_call.1} parent=0
    _
  %s6 = ssub.s32 1, %s4
  %s7 = scalar_select 0, %s6, %s4
  $region1: #{tpu_custom_call.1} parent=0
    #allocation2 [shape = 'u8[65536]{0}', space=vmem, size = 0x10000, scoped, tag = 'input window, operand 0']
    #allocation3 [shape = 's32[2]{0}', space=sflag, size = 0x8, scoped, tag = 'scoped memory for tpu_custom_call.1']
    #allocation4 [shape = 's32[2]{0}', space=sflag, size = 0x8, scoped, tag = 'scoped memory for tpu_custom_call.1']
    #allocation5 [shape = 'u8[65536]{0}', space=vmem, size = 0x10000, scoped, tag = 'output window, operand 0']
    %8 = vsyncpa [#allocation3], 0
    %s9 = scalar_lea.sflag [#allocation3], 1
    %10 = vsyncpa %s9, 0
    %11 = vsyncpa [#allocation4], 0
    %s12 = scalar_lea.sflag [#allocation4], 1
    %13 = vsyncpa %s12, 0
    loop: start=0, step=1, limit=4
    $region2: #{tpu_custom_call.1} parent=1 // loop_pre_header
      _
    $region3: #{tpu_custom_call.1} parent=1 // loop_header
      %s15 = sphi 0, %s19
      %p16 = scmp.ge.s32.totalorder %s15, 4
      %s25 = sphi 0, %s27
      %s28 = sphi 0, %s25
      %s29 = sphi 0, %s28
      %s45 = sphi 0, %s29
      %s49 = sphi 0, %s49
      %s51 = sphi 0, %s49
      %s52 = sphi 0, %s51
      %s66 = sphi 0, %s52
      %s70 = sphi 0, %s70
      %s72 = sphi 0, %s70
      %s73 = sphi 0, %s72
      %s87 = sphi 0, %s73
      %s93 = sphi 0, %s95
      %s96 = sphi 0, %s93
      %s97 = sphi 0, %s96
      %s113 = sphi 0, %s97
    $region4: #{tpu_custom_call.1} parent=1 // loop_header_branch
      %18 = sbr.rel (%p16) target = $region8
    $region5: #{tpu_custom_call.1} parent=1 // loop_body
      %s20 = ssub.s32 %s15, 1
      %s21 = ssub.s32 %s15, 2
      %s22 = sadd.s32 %s15, 1
      %s23 = ssub.s32 %s15, %s22
      %p24 = scmp.eq.s32.totalorder %s23, 0
      %s26 = sadd.s32 %s25, 1
      %s27 = scalar_select %p24, %s25, %s26
      %p30 = pneg %p24
      %p31 = scmp.eq.s32.totalorder %s15, 1
      %p32 = por %p30, %p31
      %p33 = scmp.ne.s32.totalorder %s25, %s28
      %p34 = scmp.eq.s32.totalorder %s15, 0
      %p35 = por %p33, %p34
      %p36 = scmp.ne.s32.totalorder %s25, %s28
      %p37 = scmp.eq.s32.totalorder %s20, 1
      %p38 = por %p36, %p37
      %p39 = scmp.ne.s32.totalorder %s28, %s29
      %p40 = scmp.eq.s32.totalorder %s20, 0
      %p41 = por %p39, %p40
      %p42 = scmp.ne.s32.totalorder %s28, %s29
      %p43 = scmp.eq.s32.totalorder %s21, 1
      %p44 = por %p42, %p43
      %p46 = scmp.ne.s32.totalorder %s29, %s45
      %p47 = scmp.eq.s32.totalorder %s21, 0
      %p48 = por %p46, %p47
      %s50 = sadd.s32 %s49, 1
      %p53 = scmp.eq.s32.totalorder %s15, 1
      %p54 = scmp.ne.s32.totalorder %s49, %s51
      %p55 = scmp.eq.s32.totalorder %s15, 0
      %p56 = por %p54, %p55
      %p57 = scmp.ne.s32.totalorder %s49, %s51
      %p58 = scmp.eq.s32.totalorder %s20, 1
      %p59 = por %p57, %p58
      %p60 = scmp.ne.s32.totalorder %s51, %s52
      %p61 = scmp.eq.s32.totalorder %s20, 0
      %p62 = por %p60, %p61
      %p63 = scmp.ne.s32.totalorder %s51, %s52
      %p64 = scmp.eq.s32.totalorder %s21, 1
      %p65 = por %p63, %p64
      %p67 = scmp.ne.s32.totalorder %s52, %s66
      %p68 = scmp.eq.s32.totalorder %s21, 0
      %p69 = por %p67, %p68
      %s71 = sadd.s32 %s70, 1
      %p74 = scmp.eq.s32.totalorder %s15, 1
      %p75 = scmp.ne.s32.totalorder %s70, %s72
      %p76 = scmp.eq.s32.totalorder %s15, 0
      %p77 = por %p75, %p76
      %p78 = scmp.ne.s32.totalorder %s70, %s72
      %p79 = scmp.eq.s32.totalorder %s20, 1
      %p80 = por %p78, %p79
      %p81 = scmp.ne.s32.totalorder %s72, %s73
      %p82 = scmp.eq.s32.totalorder %s20, 0
      %p83 = por %p81, %p82
      %p84 = scmp.ne.s32.totalorder %s72, %s73
      %p85 = scmp.eq.s32.totalorder %s21, 1
      %p86 = por %p84, %p85
      %p88 = scmp.ne.s32.totalorder %s73, %s87
      %p89 = scmp.eq.s32.totalorder %s21, 0
      %p90 = por %p88, %p89
      %s91 = ssub.s32 %s15, %s22
      %p92 = scmp.eq.s32.totalorder %s91, 0
      %s94 = sadd.s32 %s93, 1
      %s95 = scalar_select %p92, %s93, %s94
      %p98 = pneg %p92
      %p99 = scmp.eq.s32.totalorder %s15, 1
      %p100 = por %p98, %p99
      %p101 = scmp.ne.s32.totalorder %s93, %s96
      %p102 = scmp.eq.s32.totalorder %s15, 0
      %p103 = por %p101, %p102
      %p104 = scmp.ne.s32.totalorder %s93, %s96
      %p105 = scmp.eq.s32.totalorder %s20, 1
      %p106 = por %p104, %p105
      %p107 = scmp.ne.s32.totalorder %s96, %s97
      %p108 = scmp.eq.s32.totalorder %s20, 0
      %p109 = por %p107, %p108
      %p110 = scmp.ne.s32.totalorder %s96, %s97
      %p111 = scmp.eq.s32.totalorder %s21, 1
      %p112 = por %p110, %p111
      %p114 = scmp.ne.s32.totalorder %s97, %s113
      %p115 = scmp.eq.s32.totalorder %s21, 0
      %p116 = por %p114, %p115
      %p117 = scmp.le.s32.totalorder 1, %s15
      %p118 = scmp.lt.s32.totalorder %s15, 3
      %p119 = pnand %p117, %p118
      %p120 = pneg %p119
      // Predicated region
      $region9: #{tpu_custom_call.1} parent=5 // pred_check
        _
      $region10: #{tpu_custom_call.1} parent=5 // pred_check_branch
        %122 = sbr.rel (%p119) target = $region12
      $region11: #{tpu_custom_call.1} parent=5 // pred_region
        %s123 = ssub.s32 %s15, 1
        // Predicated region
        $region13: #{tpu_custom_call.1} parent=11 // pred_check
          %p124 = pneg %p62
        $region14: #{tpu_custom_call.1} parent=11 // pred_check_branch
          %126 = sbr.rel (%p124) target = $region16
        $region15: #{tpu_custom_call.1} parent=11 // pred_region
          _
        $region16: #{tpu_custom_call.1} parent=11 // pred_fallthru
          _
        // Predicated region
        $region17: #{tpu_custom_call.1} parent=11 // pred_check
          %p127 = pneg %p83
        $region18: #{tpu_custom_call.1} parent=11 // pred_check_branch
          %129 = sbr.rel (%p127) target = $region20
        $region19: #{tpu_custom_call.1} parent=11 // pred_region
          _
        $region20: #{tpu_custom_call.1} parent=11 // pred_fallthru
          _
      $region12: #{tpu_custom_call.1} parent=5 // pred_fallthru
        _
      %p130 = scmp.lt.s32.totalorder %s15, 2
      // Predicated region
      $region21: #{tpu_custom_call.1} parent=5 // pred_check
        %p131 = pneg %p130
      $region22: #{tpu_custom_call.1} parent=5 // pred_check_branch
        %133 = sbr.rel (%p131) target = $region24
      $region23: #{tpu_custom_call.1} parent=5 // pred_region
        // Predicated region
        $region25: #{tpu_custom_call.1} parent=23 // pred_check
          %p134 = pneg %p35
        $region26: #{tpu_custom_call.1} parent=23 // pred_check_branch
          %136 = sbr.rel (%p134) target = $region28
        $region27: #{tpu_custom_call.1} parent=23 // pred_region
          %s137 = sand.u32 %s25, 1
          %s138 = scalar_lea.sflag [#allocation3], %s137
          %s139 = sand.u32 %s25, 1
          %s140 = smul.addr %s139, 64
          %s141 = scalar_lea.vmem [#allocation2], %s140
          %143 = vsyncadd %s138, 0
          %s144 = smul.addr %s15, 8
          %s145 = smul.addr %s144, 8
          %s146 = scalar_lea.hbm %s0, %s145
          %s147 = sshll.u32 %s146, 4
          %s148 = int_to_ptr.hbm [resolvable:$true] %s147
          %s149 = sshll.u32 %s141, 4
          %s150 = int_to_ptr.vmem [resolvable:$true] %s149
          %155 = dma.hbm_to_vmem [thread:$0]  %s148, 1024, %s150, %s138, 256, 256, 16
        $region28: #{tpu_custom_call.1} parent=23 // pred_fallthru
          _
      $region24: #{tpu_custom_call.1} parent=5 // pred_fallthru
        _
      %p156 = scmp.le.s32.totalorder 1, %s15
      %p157 = scmp.lt.s32.totalorder %s15, 3
      %p158 = pnand %p156, %p157
      %p159 = pneg %p158
      // Predicated region
      $region29: #{tpu_custom_call.1} parent=5 // pred_check
        _
      $region30: #{tpu_custom_call.1} parent=5 // pred_check_branch
        %161 = sbr.rel (%p158) target = $region32
      $region31: #{tpu_custom_call.1} parent=5 // pred_region
        %s162 = ssub.s32 %s15, 1
        %s163 = sand.u32 %s28, 1
        %s164 = scalar_lea.sflag [#allocation3], %s163
        %s165 = sand.u32 %s28, 1
        %s166 = smul.addr %s165, 64
        %s167 = scalar_lea.vmem [#allocation2], %s166
        // Predicated region
        $region33: #{tpu_custom_call.1} parent=31 // pred_check
          %p168 = pneg %p41
        $region34: #{tpu_custom_call.1} parent=31 // pred_check_branch
          %170 = sbr.rel (%p168) target = $region36
        $region35: #{tpu_custom_call.1} parent=31 // pred_region
          %172 = dma.done %s164, 1024
        $region36: #{tpu_custom_call.1} parent=31 // pred_fallthru
          _
        %s173 = sand.u32 %s28, 1
        %s174 = scalar_lea.sflag [#allocation3], %s173
        %s175 = sand.u32 %s28, 1
        %s176 = smul.addr %s175, 64
        %s177 = scalar_lea.vmem [#allocation2], %s176
        %p178 = pneg %p41
        %p179 = pneg %p38
        %p180 = pneg %p62
        %p181 = pneg %p59
        %p182 = pneg %p83
        %p183 = pneg %p80
        %p184 = pneg %p109
        %p185 = pneg %p106
        %s186 = sand.u32 %s96, 1
        %s187 = scalar_lea.sflag [#allocation4], %s186
        %s188 = sand.u32 %s96, 1
        %s189 = smul.addr %s188, 64
        %s190 = scalar_lea.vmem [#allocation5], %s189
        %v191 = vld [vmem:[%s167] sm:$0xff]
        %v192 = vld [vmem:[%s167 + $0x8] sm:$0xff]
        %v193 = vld [vmem:[%s167 + $0x10] sm:$0xff]
        %v194 = vld [vmem:[%s167 + $0x18] sm:$0xff]
        %v195 = vld [vmem:[%s167 + $0x20] sm:$0xff]
        %v196 = vld [vmem:[%s167 + $0x28] sm:$0xff]
        %v197 = vld [vmem:[%s167 + $0x30] sm:$0xff]
        %v198 = vld [vmem:[%s167 + $0x38] sm:$0xff]
        %v199 = vadd.f32 %v191, %v192
        %200 = vadd.xlane.f32.xlu0 %v199
        %v201 = vpop.xlane.xlu0 %200
        %v202 = vadd.f32 %v193, %v194
        %203 = vadd.xlane.f32.xlu0 %v202
        %v204 = vpop.xlane.xlu0 %203
        %v205 = vadd.f32 %v195, %v196
        %206 = vadd.xlane.f32.xlu0 %v205
        %v207 = vpop.xlane.xlu0 %206
        %v208 = vadd.f32 %v197, %v198
        %209 = vadd.xlane.f32.xlu0 %v208
        %v210 = vpop.xlane.xlu0 %209
        %v211 = vmul.f32 %v201, 0.00390625
        %v212 = vmul.f32 %v204, 0.00390625
        %v213 = vmul.f32 %v207, 0.00390625
        %v214 = vmul.f32 %v210, 0.00390625
        %v215 = vld [vmem:[%s1] sm:$0xff]
        %v216 = vld [vmem:[%s1 + $0x8] sm:$0xff]
        %v217 = vld [vmem:[%s1 + $0x10] sm:$0xff]
        %v218 = vld [vmem:[%s1 + $0x18] sm:$0xff]
        %v223 = vlaneseq
        %v224 = vand.u32 %v223, 127
        %v225 = vperm.slane %v211, %v224
        %v226 = vadd.s32 %v224, 4294967288
        %v227 = vperm.slane %v212, %v226
        %vm228 = vcmask 130112
        %v229 = vsel %vm228, %v227, %v225
        %v230 = vadd.s32 %v224, 4294967280
        %v231 = vperm.slane %v213, %v230
        %vm232 = vcmask 195712
        %v233 = vsel %vm232, %v231, %v229
        %v234 = vadd.s32 %v224, 4294967272
        %v235 = vperm.slane %v214, %v234
        %vm236 = vcmask 261312
        %v237 = vsel %vm236, %v235, %v233
        %vm238 = vcmask 261120
        %v239 = vsel %vm238, %v237, 0
        %241 = vmatpush.msra.mxu0 0.0
        %242 = vmatpush.msra.mxu0 0.0
        %243 = vmatpush.msra.mxu0 0.0
        %244 = vmatpush.msra.mxu0 0.0
        %245 = vmatpush.msra.mxu0 0.0
        %246 = vmatpush.msra.mxu0 0.0
        %247 = vmatpush.msra.mxu0 0.0
        %248 = vmatpush.msra.mxu0 0.0
        %249 = vmatpush.msra.mxu0 0.0
        %250 = vmatpush.msra.mxu0 0.0
        %251 = vmatpush.msra.mxu0 0.0
        %252 = vmatpush.msra.mxu0 0.0
        %253 = vmatpush.msra.mxu0 %v218
        %254 = vmatpush.msra.mxu0 %v217
        %255 = vmatpush.msra.mxu0 %v216
        %256 = vmatpush.msra.mxu0 %v215
        %257 = vmatmul.f32.gmra.mxu0 %v239
        %v258 = vpop.f32.mrf.mxu0
        %v259 = vadd.f32 0.0, %v258
        %260 = vdwg.mxu0
        %v261 = vmax.f32 %v259, 0.0
        %v262 = vld [vmem:[%s2] sm:$0x3]
        %vm263 = vcmask 15360
        %v265 = vsel %vm263, %v261, 0
        %vm267 = vcmask 1041408
        %v269 = vsel %vm267, %v262, 0
        %271 = vmatpush.msra.mxu0 0.0
        %272 = vmatpush.msra.mxu0 0.0
        %273 = vmatpush.msra.mxu0 0.0
        %274 = vmatpush.msra.mxu0 0.0
        %275 = vmatpush.msra.mxu0 0.0
        %276 = vmatpush.msra.mxu0 0.0
        %277 = vmatpush.msra.mxu0 0.0
        %278 = vmatpush.msra.mxu0 0.0
        %279 = vmatpush.msra.mxu0 0.0
        %280 = vmatpush.msra.mxu0 0.0
        %281 = vmatpush.msra.mxu0 0.0
        %282 = vmatpush.msra.mxu0 0.0
        %283 = vmatpush.msra.mxu0 0.0
        %284 = vmatpush.msra.mxu0 0.0
        %285 = vmatpush.msra.mxu0 0.0
        %286 = vmatpush.msra.mxu0 %v269
        %287 = vmatmul.f32.gmra.mxu0 %v265
        %v288 = vpop.f32.mrf.mxu0
        %v289 = vadd.f32 0.0, %v288
        %290 = vdwg.mxu0
        %v291 = vxor.u32 %v289, 2147483648
        %v292 = vmul.f32 %v291, 1.442695
        %v293 = vpow.pop %v292
        %v294 = vadd.f32 %v293, 1.0
        %v295 = vrcp.pop %v294
        %v296 = vmul.f32 %v294, %v295
        %v297 = vsub.f32 1.0, %v296
        %v298 = vmul.f32 %v295, %v297
        %v299 = vadd.f32 %v295, %v298
        %vm300 = vweird.f32 %v294
        %vm301 = vweird.f32 %v295
        %vm302 = vmor %vm300, %vm301
        %v303 = vsel %vm302, %v295, %v299
        %v304 = vand.u32 2147483647, %v294
        %vm305 = vcmp.eq.f32.partialorder %v304, 8.507059e+37
        %v306 = vand.u32 %v294, 2147483648
        %v307 = vor.u32 1.1754944e-38, %v306
        %v308 = vsel %vm305, %v307, %v303
        %v309 = vmul.f32 1.0, %v308
        %v310 = vperm.slane %v309, 0
        %v311 = vlaneseq
        %v312 = vshrl.u32 %v311, 7
        %314 = vset.pattern.permute.xlu0 %v312
        %315 = vperm.xlu0 %314, %v310
        %v316 = vpop.permute.xlu0 %315
        %v317 = vlaneseq
        %v318 = vshrl.u32 %v317, 7
        %v319 = vadd.s32 %v318, 8
        %320 = vset.pattern.permute.xlu0 %v319
        %321 = vperm.xlu0 %320, %v310
        %v322 = vpop.permute.xlu0 %321
        %v323 = vlaneseq
        %v324 = vshrl.u32 %v323, 7
        %v325 = vadd.s32 %v324, 16
        %326 = vset.pattern.permute.xlu0 %v325
        %327 = vperm.xlu0 %326, %v310
        %v328 = vpop.permute.xlu0 %327
        %v329 = vlaneseq
        %v330 = vshrl.u32 %v329, 7
        %v331 = vadd.s32 %v330, 24
        %332 = vset.pattern.permute.xlu0 %v331
        %333 = vperm.xlu0 %332, %v310
        %v334 = vpop.permute.xlu0 %333
        %v335 = vmul.f32 %v191, %v316
        %v336 = vmul.f32 %v192, %v316
        %v337 = vmul.f32 %v193, %v322
        %v338 = vmul.f32 %v194, %v322
        %v339 = vmul.f32 %v195, %v328
        %v340 = vmul.f32 %v196, %v328
        %v341 = vmul.f32 %v197, %v334
        %v342 = vmul.f32 %v198, %v334
        %343 = vst [vmem:[%s190] sm:$0xff] %v335
        %344 = vst [vmem:[%s190 + $0x8] sm:$0xff] %v336
        %345 = vst [vmem:[%s190 + $0x10] sm:$0xff] %v337
        %346 = vst [vmem:[%s190 + $0x18] sm:$0xff] %v338
        %347 = vst [vmem:[%s190 + $0x20] sm:$0xff] %v339
        %348 = vst [vmem:[%s190 + $0x28] sm:$0xff] %v340
        %349 = vst [vmem:[%s190 + $0x30] sm:$0xff] %v341
        %350 = vst [vmem:[%s190 + $0x38] sm:$0xff] %v342
        %s351 = sand.u32 %s96, 1
        %s352 = scalar_lea.sflag [#allocation4], %s351
        %s353 = sand.u32 %s96, 1
        %s354 = smul.addr %s353, 64
        %s355 = scalar_lea.vmem [#allocation5], %s354
        // Predicated region
        $region37: #{tpu_custom_call.1} parent=31 // pred_check
          %p356 = pneg %p106
        $region38: #{tpu_custom_call.1} parent=31 // pred_check_branch
          %358 = sbr.rel (%p356) target = $region40
        $region39: #{tpu_custom_call.1} parent=31 // pred_region
          %360 = vsyncadd %s352, 0
          %s361 = smul.addr %s20, 8
          %s362 = smul.addr %s361, 8
          %s363 = scalar_lea.hbm %s3, %s362
          %s364 = sshll.u32 %s355, 4
          %s365 = int_to_ptr.vmem [resolvable:$true] %s364
          %s366 = sshll.u32 %s363, 4
          %s367 = int_to_ptr.hbm [resolvable:$true] %s366
          %372 = dma.vmem_to_hbm [thread:$0]  %s365, 1024, %s367, %s352, 256, 256, 16
        $region40: #{tpu_custom_call.1} parent=31 // pred_fallthru
          _
      $region32: #{tpu_custom_call.1} parent=5 // pred_fallthru
        _
      %p373 = scmp.le.s32.totalorder 2, %s15
      // Predicated region
      $region41: #{tpu_custom_call.1} parent=5 // pred_check
        %p374 = pneg %p373
      $region42: #{tpu_custom_call.1} parent=5 // pred_check_branch
        %376 = sbr.rel (%p374) target = $region44
      $region43: #{tpu_custom_call.1} parent=5 // pred_region
        %s377 = ssub.s32 %s15, 2
        // Predicated region
        $region45: #{tpu_custom_call.1} parent=43 // pred_check
          %p378 = pneg %p112
        $region46: #{tpu_custom_call.1} parent=43 // pred_check_branch
          %380 = sbr.rel (%p378) target = $region48
        $region47: #{tpu_custom_call.1} parent=43 // pred_region
          %s381 = sand.u32 %s97, 1
          %s382 = scalar_lea.sflag [#allocation4], %s381
          %s383 = sand.u32 %s97, 1
          %s384 = smul.addr %s383, 64
          %s385 = scalar_lea.vmem [#allocation5], %s384
          %387 = dma.done %s382, 1024
        $region48: #{tpu_custom_call.1} parent=43 // pred_fallthru
          _
      $region44: #{tpu_custom_call.1} parent=5 // pred_fallthru
        _
    $region6: #{tpu_custom_call.1} parent=1 // loop_footer
      %s19 = sadd.s32 1, %s15
    $region7: #{tpu_custom_call.1} parent=1 // loop_footer_branch
      %14 = sbr.rel target = $region3
    $region8: #{tpu_custom_call.1} parent=1 // loop_exit
      _
    %388 = vsyncpa [#allocation3], 1
    %s389 = scalar_lea.sflag [#allocation3], 1
    %390 = vsyncpa %s389, 1
    %391 = vsyncpa [#allocation4], 1
    %s392 = scalar_lea.sflag [#allocation4], 1
    %393 = vsyncpa %s392, 1

</llo_original>
